<compile_context>
chip_gen: v7x
topology: tpu7x:2x2x1
jax: 0.10.0
libtpu: 0.0.40
codegen_flags: <defaults>
</compile_context>

<pallas_src>
import jax
import jax.numpy as jnp
from jax import lax
from jax.experimental import pallas as pl
from jax.experimental.pallas import tpu as pltpu


_TB_MAX = 8192  # max batch rows per grid step (VMEM stays ~1-2 MB at this size)


def _round_up(x, m):
    return ((x + m - 1) // m) * m


def _critic_kernel(x_ref, w1_ref, b1w2_ref, b2_ref, o_ref):
    # fc1 on the MXU.  Contract the feature dim of both operands so the
    # layout change happens inside the matmul (no wrapper transpose):
    #   (hidden, ni) x (tb, ni)^T -> (hidden, tb)
    h = lax.dot_general(
        w1_ref[...], x_ref[...],
        dimension_numbers=(((1,), (1,)), ((), ())),
        preferred_element_type=jnp.float32,
    )
    b1 = b1w2_ref[:, 0:1]                     # (hidden, 1)
    w2 = b1w2_ref[:, 1:2]                     # (hidden, 1)
    h = jnp.maximum(h + b1, 0.0)              # bias broadcast + ReLU on the VPU
    # fc2 (hidden -> 1) off the MXU: VPU multiply + sublane reduction (XLU),
    # producing a lane-dense (1, tb) block directly.
    s = jnp.sum(h * w2, axis=0, keepdims=True)
    o_ref[...] = (s + b2_ref[0]).astype(o_ref.dtype)


def pack_critic_params(w1, b1, w2, b2):
    """One-time parameter packing (params are fixed across forward calls).

    w1: (num_inputs, hidden)  == PyTorch fc1.weight.T
    b1: (hidden,)             == fc1.bias
    w2: (hidden, 1)           == fc2.weight.T
    b2: (1,)                  == fc2.bias
    """
    num_inputs, hidden = w1.shape
    w1_t = jnp.asarray(w1.T)                                      # (hidden, ni)
    b1w2 = jnp.stack([b1.reshape(hidden), w2.reshape(hidden)], 1)  # (hidden, 2)
    b2_s = b2.reshape(1)
    return w1_t, b1w2, b2_s


def a2c_critic_forward(state, w1_t, b1w2, b2_s):
    """state: (B, num_inputs) f32, params from pack_critic_params.
    Returns (B, 1) f32 value estimates."""
    B, num_inputs = state.shape
    hidden = w1_t.shape[0]
    assert w1_t.shape == (hidden, num_inputs)
    assert b1w2.shape == (hidden, 2)

    # Batch tiling: one whole-batch tile when it fits; otherwise 128-aligned
    # tiles with an even tile count (balanced across v7x's two TensorCores).
    if B <= _TB_MAX:
        tb = B
        num_tiles = 1
    else:
        nt = pl.cdiv(B, _TB_MAX)
        nt = nt + (nt % 2)                    # even tile count for megacore
        tb = _round_up(pl.cdiv(B, nt), 128)   # lane-aligned tile
        num_tiles = pl.cdiv(B, tb)            # ragged tail handled by Pallas

    out = pl.pallas_call(
        _critic_kernel,
        out_shape=jax.ShapeDtypeStruct((1, B), jnp.float32),
        grid=(num_tiles,),
        in_specs=[
            pl.BlockSpec((tb, num_inputs), lambda i: (i, 0)),       # state tile (native layout)
            pl.BlockSpec((hidden, num_inputs), lambda i: (0, 0)),   # resident fc1 weight
            pl.BlockSpec((hidden, 2), lambda i: (0, 0)),            # resident [b1 | w2]
            pl.BlockSpec(memory_space=pltpu.MemorySpace.SMEM),      # b2 scalar in SMEM
        ],
        out_specs=pl.BlockSpec((1, tb), lambda i: (0, i)),          # lane-dense output
        compiler_params=pltpu.CompilerParams(
            dimension_semantics=("parallel",),
        ),
    )(state, w1_t, b1w2, b2_s)

    # (1, B) -> (B, 1): same row-major data, metadata-only reshape.
    return out.reshape(B, 1)


def _reference(state, w1, b1, w2, b2):
    h = jnp.maximum(state @ w1 + b1, 0.0)
    return h @ w2 + b2


if __name__ == "__main__":
    # Small shapes consistent with the module: batch=8, num_inputs=16, hidden=32
    B, num_inputs, hidden = 8, 16, 32

    key = jax.random.PRNGKey(0)
    k_x, k_w1, k_b1, k_w2, k_b2 = jax.random.split(key, 5)

    state = jax.random.normal(k_x, (B, num_inputs), dtype=jnp.float32)

    # Deterministic parameter init (PyTorch Linear-style uniform bounds),
    # stored in [in, out] layout.
    bound1 = 1.0 / (num_inputs ** 0.5)
    bound2 = 1.0 / (hidden ** 0.5)
    w1 = jax.random.uniform(k_w1, (num_inputs, hidden), jnp.float32, -bound1, bound1)
    b1 = jax.random.uniform(k_b1, (hidden,), jnp.float32, -bound1, bound1)
    w2 = jax.random.uniform(k_w2, (hidden, 1), jnp.float32, -bound2, bound2)
    b2 = jax.random.uniform(k_b2, (1,), jnp.float32, -bound2, bound2)

    # One-time packing (not a per-call cost).
    w1_t, b1w2, b2_s = pack_critic_params(w1, b1, w2, b2)

    # 1) Small batch (single whole-batch tile).
    out = jax.block_until_ready(a2c_critic_forward(state, w1_t, b1w2, b2_s))
    ref = _reference(state, w1, b1, w2, b2)
    assert out.shape == (B, 1)
    assert jnp.allclose(out, ref, atol=1e-5, rtol=1e-5), "mismatch vs JAX reference"

    # 2) Medium batch, not a multiple of 128 (still a single full-array tile).
    B2 = 1300
    state2 = jax.random.normal(jax.random.PRNGKey(1), (B2, num_inputs), jnp.float32)
    out2 = jax.block_until_ready(a2c_critic_forward(state2, w1_t, b1w2, b2_s))
    ref2 = _reference(state2, w1, b1, w2, b2)
    assert out2.shape == (B2, 1)
    assert jnp.allclose(out2, ref2, atol=1e-5, rtol=1e-5), "mismatch (single large tile)"

    # 3) Large batch: multi-tile path with even tile count and a ragged tail.
    B3 = 20000
    state3 = jax.random.normal(jax.random.PRNGKey(2), (B3, num_inputs), jnp.float32)
    out3 = jax.block_until_ready(a2c_critic_forward(state3, w1_t, b1w2, b2_s))
    ref3 = _reference(state3, w1, b1, w2, b2)
    assert out3.shape == (B3, 1)
    assert jnp.allclose(out3, ref3, atol=1e-5, rtol=1e-5), "mismatch (tiled, ragged tail)"

    print("KERNEL_OK")
</pallas_src>

<mosaic_0001>
module attributes {stable_mosaic.version = 11 : i64} {
  func.func @_critic_kernel(%arg0: i32, %arg1: memref<8x16xf32, #tpu.memory_space<vmem>>, %arg2: memref<32x16xf32, #tpu.memory_space<vmem>>, %arg3: memref<32x2xf32, #tpu.memory_space<vmem>>, %arg4: memref<1xf32, #tpu.memory_space<smem>>, %arg5: memref<1x8xf32, #tpu.memory_space<vmem>>) attributes {dimension_semantics = [#tpu.dimension_semantics<parallel>], iteration_bounds = array<i64: 1>, scalar_prefetch = 0 : i64, scratch_operands = 0 : i64, tpu.core_type = #tpu.core_type<tc>, window_params = [{transform_indices = @transform_0, window_bounds = array<i64: 8, 16>}, {pipeline_mode = #tpu.pipeline_mode<synchronous>, transform_indices = @transform_1, window_bounds = array<i64: 32, 16>}, {pipeline_mode = #tpu.pipeline_mode<synchronous>, transform_indices = @transform_2, window_bounds = array<i64: 32, 2>}, {transform_indices = @transform_3, window_bounds = array<i64: 1>}, {transform_indices = @transform_4, window_bounds = array<i64: 1, 8>}]} {
    %c0 = arith.constant 0 : index
    %c0_0 = arith.constant 0 : index
    %0 = vector.load %arg2[%c0, %c0_0] : memref<32x16xf32, #tpu.memory_space<vmem>>, vector<32x16xf32>
    %c0_1 = arith.constant 0 : index
    %c0_2 = arith.constant 0 : index
    %1 = vector.load %arg1[%c0_1, %c0_2] : memref<8x16xf32, #tpu.memory_space<vmem>>, vector<8x16xf32>
    %cst = arith.constant dense<0.000000e+00> : vector<32x8xf32>
    %2 = tpu.matmul %0, %1, %cst {dimension_numbers = #tpu.dot_dimension_numbers<[1], [1], [0], [0], [0, 0, 1, 0], [], []>} : vector<32x16xf32>, vector<8x16xf32>, vector<32x8xf32> -> vector<32x8xf32>
    %c0_3 = arith.constant 0 : index
    %c0_4 = arith.constant 0 : index
    %3 = vector.load %arg3[%c0_3, %c0_4] : memref<32x2xf32, #tpu.memory_space<vmem>>, vector<32x1xf32>
    %c0_5 = arith.constant 0 : index
    %c1 = arith.constant 1 : index
    %4 = vector.load %arg3[%c0_5, %c1] : memref<32x2xf32, #tpu.memory_space<vmem>>, vector<32x1xf32>
    %5 = vector.broadcast %3 : vector<32x1xf32> to vector<32x8xf32>
    %6 = arith.addf %2, %5 : vector<32x8xf32>
    %cst_6 = arith.constant 0.000000e+00 : f32
    %7 = vector.broadcast %cst_6 : f32 to vector<32x8xf32>
    %8 = arith.maximumf %6, %7 : vector<32x8xf32>
    %9 = vector.broadcast %4 : vector<32x1xf32> to vector<32x8xf32>
    %10 = arith.mulf %8, %9 : vector<32x8xf32>
    %cst_7 = arith.constant dense<0.000000e+00> : vector<8xf32>
    %11 = vector.multi_reduction <add>, %10, %cst_7 [0] : vector<32x8xf32> to vector<8xf32>
    %12 = vector.shape_cast %11 : vector<8xf32> to vector<1x8xf32>
    %c0_8 = arith.constant 0 : index
    %13 = memref.load %arg4[%c0_8] : memref<1xf32, #tpu.memory_space<smem>>
    %14 = vector.broadcast %13 : f32 to vector<1x8xf32>
    %15 = arith.addf %12, %14 : vector<1x8xf32>
    %c0_9 = arith.constant 0 : index
    %c0_10 = arith.constant 0 : index
    %16 = vector.load %arg5[%c0_9, %c0_10] : memref<1x8xf32, #tpu.memory_space<vmem>>, vector<1x8xf32>
    tpu.vector_store %arg5[%c0_9, %c0_10], %15 {strides = array<i32>} : memref<1x8xf32, #tpu.memory_space<vmem>>, vector<1x8xf32>,
    return
  }
  func.func @transform_0(%arg0: i32) -> (i32, i32) {
    %c0_i32 = arith.constant 0 : i32
    %c0_i32_0 = arith.constant 0 : i32
    return %arg0, %c0_i32 : i32, i32
  }
  func.func @transform_1(%arg0: i32) -> (i32, i32) {
    %c0_i32 = arith.constant 0 : i32
    %c0_i32_0 = arith.constant 0 : i32
    %c0_i32_1 = arith.constant 0 : i32
    return %c0_i32, %c0_i32_0 : i32, i32
  }
  func.func @transform_2(%arg0: i32) -> (i32, i32) {
    %c0_i32 = arith.constant 0 : i32
    %c0_i32_0 = arith.constant 0 : i32
    %c0_i32_1 = arith.constant 0 : i32
    return %c0_i32, %c0_i32_0 : i32, i32
  }
  func.func @transform_3(%arg0: i32) -> i32 {
    %c0_i32 = arith.constant 0 : i32
    %c0_i32_0 = arith.constant 0 : i32
    return %c0_i32 : i32
  }
  func.func @transform_4(%arg0: i32) -> (i32, i32) {
    %c0_i32 = arith.constant 0 : i32
    %c0_i32_0 = arith.constant 0 : i32
    return %c0_i32, %arg0 : i32, i32
  }
}

</mosaic_0001>

<llo_original>
// kernel: tpu_custom_call.1
$region0: #{tpu_custom_call.1}
  #allocation0 [shape = 'u32[]', space=smem, size = 0x4, offset = 0x4, fixed_abs, tag = 'smem constant byte address 0x4 - core index']
  #allocation1 [shape = 'u32[144,128]{1,0:T(1,128)}', space=vmem, size = 0x12000, scoped, tag = 'internal scratch']
  #allocation2 [shape = 'f32[1]{0:T(128)S(6)}', space=smem, size = 0x200, scoped, tag = 'scoped memory for tpu_custom_call.1']
  %s0 = inlined_call_operand.vmem [shape: f32[8,16], index: 0, kind: input, shape index: {}]
  %s1 = inlined_call_operand.vmem [shape: f32[32,16], index: 1, kind: input, shape index: {}]
  %s2 = inlined_call_operand.vmem [shape: f32[32,2], index: 2, kind: input, shape index: {}]
  %s3 = inlined_call_operand.<no memory space> [shape: f32[1], index: 3, kind: input, shape index: {}]
  %s4 = inlined_call_operand.hbm [shape: f32[1,8], index: 4, kind: output, shape index: {}]
  %s5 = sld [smem:[#allocation0]]
  $region26: #{tpu_custom_call.1} parent=0
    _
  %s7 = ssub.s32 1, %s5
  %s8 = scalar_select 0, %s7, %s5
  %9 = sst [smem:[#allocation2]] %s3
  $region1: #{tpu_custom_call.1} parent=0
    #allocation3 [shape = 'u8[512]{0}', space=vmem, size = 0x400, scoped, tag = 'output window, operand 0, single buffered']
    #allocation4 [shape = 's32[1]{0}', space=sflag, size = 0x4, scoped, tag = 'scoped memory for tpu_custom_call.1']
    %10 = vsyncpa [#allocation4], 0
    // Predicated region
    $region2: #{tpu_custom_call.1} parent=1 // pred_check
      _
    $region3: #{tpu_custom_call.1} parent=1 // pred_check_branch
      %12 = sbr.rel (0) target = $region5
    $region4: #{tpu_custom_call.1} parent=1 // pred_region
      _
    $region5: #{tpu_custom_call.1} parent=1 // pred_fallthru
      _
    // Predicated region
    $region6: #{tpu_custom_call.1} parent=1 // pred_check
      _
    $region7: #{tpu_custom_call.1} parent=1 // pred_check_branch
      %14 = sbr.rel (0) target = $region9
    $region8: #{tpu_custom_call.1} parent=1 // pred_region
      _
    $region9: #{tpu_custom_call.1} parent=1 // pred_fallthru
      _
    // Predicated region
    $region10: #{tpu_custom_call.1} parent=1 // pred_check
      _
    $region11: #{tpu_custom_call.1} parent=1 // pred_check_branch
      %16 = sbr.rel (0) target = $region13
    $region12: #{tpu_custom_call.1} parent=1 // pred_region
      _
    $region13: #{tpu_custom_call.1} parent=1 // pred_fallthru
      _
    // Predicated region
    $region14: #{tpu_custom_call.1} parent=1 // pred_check
      _
    $region15: #{tpu_custom_call.1} parent=1 // pred_check_branch
      %18 = sbr.rel (0) target = $region17
    $region16: #{tpu_custom_call.1} parent=1 // pred_region
      _
    $region17: #{tpu_custom_call.1} parent=1 // pred_fallthru
      _
    %v19 = vld [vmem:[%s1] sm:$0xff]
    %v20 = vld [vmem:[%s1 + $0x8] sm:$0xff]
    %v21 = vld [vmem:[%s1 + $0x10] sm:$0xff]
    %v22 = vld [vmem:[%s1 + $0x18] sm:$0xff]
    %v23 = vld [vmem:[%s0] sm:$0xff]
    %v24 = vld [vmem:[%s2] sm:$0xff]
    %v25 = vld [vmem:[%s2 + $0x8] sm:$0xff]
    %v26 = vld [vmem:[%s2 + $0x10] sm:$0xff]
    %v27 = vld [vmem:[%s2 + $0x18] sm:$0xff]
    %29 = vset.pattern.permute.xlu0 0
    %30 = vperm.xlu0 %29, %v24
    %v31 = vpop.permute.xlu0 %30
    %34 = vset.pattern.permute.xlu0 0
    %35 = vperm.xlu0 %34, %v25
    %v36 = vpop.permute.xlu0 %35
    %39 = vset.pattern.permute.xlu0 0
    %40 = vperm.xlu0 %39, %v26
    %v41 = vpop.permute.xlu0 %40
    %44 = vset.pattern.permute.xlu0 0
    %45 = vperm.xlu0 %44, %v27
    %v46 = vpop.permute.xlu0 %45
    %vm48 = vcmask 130048
    %v50 = vsel %vm48, %v19, 0
    %v53 = vsel %vm48, %v20, 0
    %v56 = vsel %vm48, %v21, 0
    %v59 = vsel %vm48, %v22, 0
    %v62 = vsel %vm48, %v23, 0
    %64 = vmatprep.subr.mxu0 0.0
    %65 = vmatpush1.xpose.msra.mxu0 %v62
    %66 = vmatprep.subr.mxu0 0.0
    %67 = vmatpush1.xpose.msra.mxu0 0.0
    %68 = vmatprep.subr.mxu0 0.0
    %69 = vmatpush1.xpose.msra.mxu0 0.0
    %70 = vmatprep.subr.mxu0 0.0
    %71 = vmatpush1.xpose.msra.mxu0 0.0
    %72 = vmatprep.subr.mxu0 0.0
    %73 = vmatpush1.xpose.msra.mxu0 0.0
    %74 = vmatprep.subr.mxu0 0.0
    %75 = vmatpush1.xpose.msra.mxu0 0.0
    %76 = vmatprep.subr.mxu0 0.0
    %77 = vmatpush1.xpose.msra.mxu0 0.0
    %78 = vmatprep.subr.mxu0 0.0
    %79 = vmatpush1.xpose.msra.mxu0 0.0
    %80 = vmatprep.subr.mxu0 0.0
    %81 = vmatpush1.xpose.msra.mxu0 0.0
    %82 = vmatprep.subr.mxu0 0.0
    %83 = vmatpush1.xpose.msra.mxu0 0.0
    %84 = vmatprep.subr.mxu0 0.0
    %85 = vmatpush1.xpose.msra.mxu0 0.0
    %86 = vmatprep.subr.mxu0 0.0
    %87 = vmatpush1.xpose.msra.mxu0 0.0
    %88 = vmatprep.subr.mxu0 0.0
    %89 = vmatpush1.xpose.msra.mxu0 0.0
    %90 = vmatprep.subr.mxu0 0.0
    %91 = vmatpush1.xpose.msra.mxu0 0.0
    %92 = vmatprep.subr.mxu0 0.0
    %93 = vmatpush1.xpose.msra.mxu0 0.0
    %94 = vmatprep.subr.mxu0 0.0
    %95 = vmatpush1.xpose.msra.mxu0 0.0
    %96 = vmatprep.subr.mxu0 0.0
    %97 = vmatpush1.xpose.msra.mxu0 0.0
    %98 = vmatprep.subr.mxu0 0.0
    %99 = vmatpush1.xpose.msra.mxu0 0.0
    %100 = vmatprep.subr.mxu0 0.0
    %101 = vmatpush1.xpose.msra.mxu0 0.0
    %102 = vmatprep.subr.mxu0 0.0
    %103 = vmatpush1.xpose.msra.mxu0 0.0
    %104 = vmatprep.subr.mxu0 0.0
    %105 = vmatpush1.xpose.msra.mxu0 0.0
    %106 = vmatprep.subr.mxu0 0.0
    %107 = vmatpush1.xpose.msra.mxu0 0.0
    %108 = vmatprep.subr.mxu0 0.0
    %109 = vmatpush1.xpose.msra.mxu0 0.0
    %110 = vmatprep.subr.mxu0 0.0
    %111 = vmatpush1.xpose.msra.mxu0 0.0
    %112 = vmatprep.subr.mxu0 0.0
    %113 = vmatpush1.xpose.msra.mxu0 0.0
    %114 = vmatprep.subr.mxu0 0.0
    %115 = vmatpush1.xpose.msra.mxu0 0.0
    %116 = vmatprep.subr.mxu0 0.0
    %117 = vmatpush1.xpose.msra.mxu0 0.0
    %118 = vmatprep.subr.mxu0 0.0
    %119 = vmatpush1.xpose.msra.mxu0 0.0
    %120 = vmatprep.subr.mxu0 0.0
    %121 = vmatpush1.xpose.msra.mxu0 0.0
    %122 = vmatprep.subr.mxu0 0.0
    %123 = vmatpush1.xpose.msra.mxu0 0.0
    %124 = vmatprep.subr.mxu0 0.0
    %125 = vmatpush1.xpose.msra.mxu0 0.0
    %126 = vmatprep.subr.mxu0 0.0
    %127 = vmatpush1.xpose.msra.mxu0 0.0
    %128 = vmatprep.mubr.f32.mxu0 0.0
    %129 = vmatmul.mubr.f32.gmra.mrb[0].mxu0 %v50
    %v130 = vpop.f32.mrb[0].mxu0
    %v131 = vadd.f32 %v31, %v130
    %v132 = vpop.f32.mrb[0].mxu0
    %133 = vmatprep.mubr.f32.mxu0 0.0
    %134 = vmatmul.mubr.f32.gmra.mrb[0].mxu0 %v53
    %v135 = vpop.f32.mrb[0].mxu0
    %v136 = vadd.f32 %v36, %v135
    %v137 = vpop.f32.mrb[0].mxu0
    %138 = vmatprep.mubr.f32.mxu0 0.0
    %139 = vmatmul.mubr.f32.gmra.mrb[0].mxu0 %v56
    %v140 = vpop.f32.mrb[0].mxu0
    %v141 = vadd.f32 %v41, %v140
    %v142 = vpop.f32.mrb[0].mxu0
    %143 = vmatprep.mubr.f32.mxu0 0.0
    %144 = vmatmul.mubr.f32.gmra.mrb[0].mxu0 %v59
    %v145 = vpop.f32.mrb[0].mxu0
    %v146 = vadd.f32 %v46, %v145
    %v147 = vpop.f32.mrb[0].mxu0
    %148 = vdwg.mxu0
    %v149 = vmax.f32 %v131, 0.0
    %v150 = vmax.f32 %v136, 0.0
    %v151 = vmax.f32 %v141, 0.0
    %v152 = vmax.f32 %v146, 0.0
    %153 = vset.pattern.permute.xlu0 1
    %154 = vperm.xlu0 %153, %v24
    %v155 = vpop.permute.xlu0 %154
    %157 = vset.pattern.permute.xlu0 1
    %158 = vperm.xlu0 %157, %v25
    %v159 = vpop.permute.xlu0 %158
    %161 = vset.pattern.permute.xlu0 1
    %162 = vperm.xlu0 %161, %v26
    %v163 = vpop.permute.xlu0 %162
    %165 = vset.pattern.permute.xlu0 1
    %166 = vperm.xlu0 %165, %v27
    %v167 = vpop.permute.xlu0 %166
    %v169 = vmul.f32 %v149, %v155
    %v170 = vmul.f32 %v150, %v159
    %v171 = vmul.f32 %v151, %v163
    %v172 = vmul.f32 %v152, %v167
    %vm173 = vcmask 64512
    %v174 = vsel %vm173, %v169, 0.0
    %v175 = vsel %vm173, %v170, 0.0
    %v176 = vadd.f32 %v174, %v175
    %v177 = vsel %vm173, %v171, 0.0
    %v178 = vadd.f32 %v176, %v177
    %v179 = vsel %vm173, %v172, 0.0
    %v180 = vadd.f32 %v178, %v179
    %v181 = vrot.slane %v180, 4
    %v182 = vadd.f32 %v180, %v181
    %v183 = vrot.slane %v182, 2
    %v184 = vadd.f32 %v182, %v183
    %v185 = vrot.slane %v184, 1
    %v186 = vadd.f32 %v184, %v185
    %s187 = sld [smem:[#allocation2]]
    %v188 = vstv %s187
    %v189 = vadd.f32 %v186, %v188
    %vm190 = vcmask 57344
    %191 = vst.msk [vmem:[#allocation3] sm:$0x1] %vm190, %v189
    // Predicated region
    $region18: #{tpu_custom_call.1} parent=1 // pred_check
      _
    $region19: #{tpu_custom_call.1} parent=1 // pred_check_branch
      %193 = sbr.rel (0) target = $region21
    $region20: #{tpu_custom_call.1} parent=1 // pred_region
      %s195 = ssub.s32 16, 16
      %196 = vsyncadd [#allocation4], %s195
      %s198 = sshll.u32 [#allocation3], 4
      %s199 = int_to_ptr.vmem [resolvable:$true] %s198
      %201 = dma.vmem_to_hbm [thread:$0]  %s199, 16, %s4, [#allocation4]
    $region21: #{tpu_custom_call.1} parent=1 // pred_fallthru
      _
    // Predicated region
    $region22: #{tpu_custom_call.1} parent=1 // pred_check
      _
    $region23: #{tpu_custom_call.1} parent=1 // pred_check_branch
      %203 = sbr.rel (0) target = $region25
    $region24: #{tpu_custom_call.1} parent=1 // pred_region
      %204 = dma.done [#allocation4], 16
    $region25: #{tpu_custom_call.1} parent=1 // pred_fallthru
      _
    %205 = vsyncpa [#allocation4], 1

</llo_original>
